<compile_context>
chip_gen: v6e
topology: v6e:2x2x1
jax: 0.10.0
libtpu: 0.0.40
codegen_flags: <defaults>
</compile_context>

<pallas_src>
import functools

import jax
import jax.numpy as jnp
from jax.experimental import pallas as pl
from jax.experimental.pallas import tpu as pltpu

_LN_EPS = 1e-5
_H1 = 64            # per-head hidden 1
_H2 = 32            # per-head hidden 2
_MAX_BLOCK_B = 2048    # largest batch tile (rows)
_SINGLE_TILE_B = 1024  # up to this many rows: one tile, no grid-step overhead


def _cdiv(a, b):
    return -(-a // b)


def _round_up(x, m):
    return (x + m - 1) // m * m


def _block_diag(a, b):
    m1, n1 = a.shape
    m2, n2 = b.shape
    top = jnp.concatenate([a, jnp.zeros((m1, n2), a.dtype)], axis=1)
    bot = jnp.concatenate([jnp.zeros((m2, n1), b.dtype), b], axis=1)
    return jnp.concatenate([top, bot], axis=0)


def _choose_block_b(B):
    if B <= _SINGLE_TILE_B:
        return _round_up(B, 8)                       # one (possibly ragged) tile
    return min(_MAX_BLOCK_B, _round_up(_cdiv(B, 2), 8))   # >= 2 tiles (v7x megacore)


# ------------------------------- Pallas kernel -------------------------------

def _fused_actor_critic_kernel(x_ref, w1_ref, s1_ref, b1_ref, w2_ref, b2_ref,
                               w3_ref, b3_ref, out_ref):
    """One batch tile: shared LayerNorm stats + 3 fused (actor|critic) bf16 matmuls."""
    x = x_ref[...]                                   # [tb, D] f32
    xb = x.astype(jnp.bfloat16)

    # First matmul issues immediately (no dependence on the LN reduction);
    # the LayerNorm (with its affine already folded into w1/b1) is applied as
    # a post-correction:  h = (x@W1 - mean*colsum(W1)) * rsqrt(var) + b1.
    xw = jnp.dot(xb, w1_ref[...], preferred_element_type=jnp.float32)   # [tb, 128]

    mean = jnp.mean(x, axis=-1, keepdims=True)                          # [tb, 1]
    ex2 = jnp.mean(x * x, axis=-1, keepdims=True)
    var = jnp.maximum(ex2 - mean * mean, 0.0)
    r = jax.lax.rsqrt(var + _LN_EPS)                                    # [tb, 1]

    h = (xw - mean * s1_ref[...]) * r + b1_ref[...]
    h = jnp.maximum(h, 0.0)
    h = jnp.dot(h.astype(jnp.bfloat16), w2_ref[...],
                preferred_element_type=jnp.float32) + b2_ref[...]
    h = jnp.maximum(h, 0.0)
    out = jnp.dot(h.astype(jnp.bfloat16), w3_ref[...],
                  preferred_element_type=jnp.float32) + b3_ref[...]
    out_ref[...] = out.astype(out_ref.dtype)


# ----------------------------- one-time param prep ---------------------------

def fuse_actor_critic_params(params):
    """Fuse both heads into 3 matmuls. Call ONCE (hoisted out of the forward).

    (xn*g + b) @ W1 + b1 == xn @ (g^T*W1) + (b@W1 + b1), so the LayerNorm
    affine folds into the first Linear; the two heads are concatenated /
    block-diagonal along the hidden axes. Weights are stored bf16 for the MXU.
    """
    D = params["a_w1"].shape[0]
    action_dim = params["a_w3"].shape[1]

    a_w1 = params["a_g"].reshape(D, 1) * params["a_w1"]
    c_w1 = params["c_g"].reshape(D, 1) * params["c_w1"]
    a_b1 = params["a_b"] @ params["a_w1"] + params["a_b1"]
    c_b1 = params["c_b"] @ params["c_w1"] + params["c_b1"]

    w1 = jnp.concatenate([a_w1, c_w1], axis=1)                      # [D, 128]
    b1 = jnp.concatenate([a_b1, c_b1], axis=1)                      # [1, 128]
    w2 = _block_diag(params["a_w2"], params["c_w2"])                # [128, 64]
    b2 = jnp.concatenate([params["a_b2"], params["c_b2"]], axis=1)  # [1, 64]
    w3 = _block_diag(params["a_w3"], params["c_w3"])                # [64, action_dim+1]
    b3 = jnp.concatenate([params["a_b3"], params["c_b3"]], axis=1)  # [1, action_dim+1]

    # Pad fused output lanes to a multiple of 8 so the output block uses full
    # array dims (contiguous writeback) while keeping HBM traffic tiny.
    out_w = action_dim + 1
    out_pad = _round_up(max(out_w, 8), 8)
    w3 = jnp.pad(w3, ((0, 0), (0, out_pad - out_w)))
    b3 = jnp.pad(b3, ((0, 0), (0, out_pad - out_w)))

    w1_bf = w1.astype(jnp.bfloat16)
    w2_bf = w2.astype(jnp.bfloat16)
    w3_bf = w3.astype(jnp.bfloat16)
    # Column sums of (bf16) W1 for the mean-fold; exact w.r.t. the bf16 weights.
    s1 = jnp.sum(w1_bf.astype(jnp.float32), axis=0, keepdims=True)  # [1, 128]

    return {"w1": w1_bf, "s1": s1, "b1": b1,
            "w2": w2_bf, "b2": b2, "w3": w3_bf, "b3": b3}


# --------------------------------- forward -----------------------------------

@functools.partial(jax.jit, static_argnums=(2,))
def actor_critic_forward(x, fused, action_dim):
    """x: [B, state_dim] f32 -> (actor_logits [B, action_dim], value [B, 1])."""
    B, D = x.shape
    h1f = fused["w1"].shape[1]      # 128
    h2f = fused["w2"].shape[1]      # 64
    out_pad = fused["w3"].shape[1]  # 8 (padded action_dim+1)

    tb = _choose_block_b(B)
    grid = (_cdiv(B, tb),)          # ragged last block handled by Pallas masking

    const = lambda i: (0, 0)        # weights/biases stay VMEM-resident across steps
    in_specs = [
        pl.BlockSpec((tb, D), lambda i: (i, 0)),
        pl.BlockSpec((D, h1f), const),
        pl.BlockSpec((1, h1f), const),
        pl.BlockSpec((1, h1f), const),
        pl.BlockSpec((h1f, h2f), const),
        pl.BlockSpec((1, h2f), const),
        pl.BlockSpec((h2f, out_pad), const),
        pl.BlockSpec((1, out_pad), const),
    ]
    out_specs = pl.BlockSpec((tb, out_pad), lambda i: (i, 0))

    flops = 2 * B * (D * h1f + h1f * h2f + h2f * out_pad)
    bytes_accessed = (4 * B * (D + out_pad)
                      + 2 * (D * h1f + h1f * h2f + h2f * out_pad)
                      + 4 * (2 * h1f + h2f + out_pad))
    cost = pl.CostEstimate(flops=flops, transcendentals=B,
                           bytes_accessed=bytes_accessed)

    fused_out = pl.pallas_call(
        _fused_actor_critic_kernel,
        out_shape=jax.ShapeDtypeStruct((B, out_pad), jnp.float32),
        grid=grid,
        in_specs=in_specs,
        out_specs=out_specs,
        compiler_params=pltpu.CompilerParams(
            dimension_semantics=("parallel",),
            vmem_limit_bytes=32 * 1024 * 1024),
        cost_estimate=cost,
    )(x, fused["w1"], fused["s1"], fused["b1"],
      fused["w2"], fused["b2"], fused["w3"], fused["b3"])

    actor_logits = fused_out[:, :action_dim]
    value = fused_out[:, action_dim:action_dim + 1]
    return actor_logits, value


# ----------------------------- reference & init ------------------------------

def _layernorm(x, gamma, beta, eps=_LN_EPS):
    mean = jnp.mean(x, axis=-1, keepdims=True)
    xc = x - mean
    var = jnp.mean(xc * xc, axis=-1, keepdims=True)
    return xc * jax.lax.rsqrt(var + eps) * gamma + beta


def reference_forward(x, params):
    """Pure-JAX f32 reference identical to the PyTorch forward."""
    def head(g, b, w1, b1, w2, b2, w3, b3):
        h = _layernorm(x, g, b)
        h = jnp.maximum(h @ w1 + b1, 0.0)
        h = jnp.maximum(h @ w2 + b2, 0.0)
        return h @ w3 + b3

    a = head(params["a_g"], params["a_b"], params["a_w1"], params["a_b1"],
             params["a_w2"], params["a_b2"], params["a_w3"], params["a_b3"])
    c = head(params["c_g"], params["c_b"], params["c_w1"], params["c_b1"],
             params["c_w2"], params["c_b2"], params["c_w3"], params["c_b3"])
    return a, c


def init_params(key, state_dim, action_dim):
    """Deterministic synthetic params (shapes match the PyTorch module).
    LayerNorm gamma/beta get a small perturbation so the affine-fold path is
    exercised (PyTorch defaults are gamma=1, beta=0)."""
    ks = jax.random.split(key, 10)

    def lin(k, fan_in, fan_out):
        kw, kb = jax.random.split(k)
        bound = 1.0 / jnp.sqrt(fan_in)
        w = jax.random.uniform(kw, (fan_in, fan_out), jnp.float32, -bound, bound)
        b = jax.random.uniform(kb, (1, fan_out), jnp.float32, -bound, bound)
        return w, b

    params = {}
    params["a_g"] = 1.0 + 0.1 * jax.random.normal(ks[6], (1, state_dim), jnp.float32)
    params["a_b"] = 0.1 * jax.random.normal(ks[7], (1, state_dim), jnp.float32)
    params["a_w1"], params["a_b1"] = lin(ks[0], state_dim, _H1)
    params["a_w2"], params["a_b2"] = lin(ks[1], _H1, _H2)
    params["a_w3"], params["a_b3"] = lin(ks[2], _H2, action_dim)

    params["c_g"] = 1.0 + 0.1 * jax.random.normal(ks[8], (1, state_dim), jnp.float32)
    params["c_b"] = 0.1 * jax.random.normal(ks[9], (1, state_dim), jnp.float32)
    params["c_w1"], params["c_b1"] = lin(ks[3], state_dim, _H1)
    params["c_w2"], params["c_b2"] = lin(ks[4], _H1, _H2)
    params["c_w3"], params["c_b3"] = lin(ks[5], _H2, 1)
    return params


if __name__ == "__main__":
    state_dim = 16
    action_dim = 4

    key = jax.random.PRNGKey(0)
    k_x1, k_x2, k_x3, k_p = jax.random.split(key, 4)
    params = init_params(k_p, state_dim, action_dim)
    fused = fuse_actor_critic_params(params)        # one-time weight fusion

    # bf16 MXU operands -> compare against the f32 reference with ~1e-2 slack.
    ATOL, RTOL = 2e-2, 2e-2

    def check(x):
        a, v = actor_critic_forward(x, fused, action_dim)
        jax.block_until_ready((a, v))
        ra, rv = reference_forward(x, params)
        assert a.shape == (x.shape[0], action_dim)
        assert v.shape == (x.shape[0], 1)
        assert jnp.allclose(a, ra, atol=ATOL, rtol=RTOL), \
            float(jnp.max(jnp.abs(a - ra)))
        assert jnp.allclose(v, rv, atol=ATOL, rtol=RTOL), \
            float(jnp.max(jnp.abs(v - rv)))

    # Small batch (single aligned tile).
    check(jax.random.normal(k_x1, (8, state_dim), jnp.float32))
    # Non-multiple-of-8 batch: single tile with a masked ragged edge.
    check(jax.random.normal(k_x2, (37, state_dim), jnp.float32))
    # Larger batch: 2 grid steps ("parallel" axis / megacore) + ragged last tile.
    check(jax.random.normal(k_x3, (2600, state_dim), jnp.float32))

    print("KERNEL_OK")
</pallas_src>

<mosaic_0001>
module attributes {stable_mosaic.version = 11 : i64} {
  func.func @_fused_actor_critic_kernel(%arg0: i32, %arg1: memref<8x16xf32, #tpu.memory_space<vmem>>, %arg2: memref<16x128xbf16, #tpu.memory_space<vmem>>, %arg3: memref<1x128xf32, #tpu.memory_space<vmem>>, %arg4: memref<1x128xf32, #tpu.memory_space<vmem>>, %arg5: memref<128x64xbf16, #tpu.memory_space<vmem>>, %arg6: memref<1x64xf32, #tpu.memory_space<vmem>>, %arg7: memref<64x8xbf16, #tpu.memory_space<vmem>>, %arg8: memref<1x8xf32, #tpu.memory_space<vmem>>, %arg9: memref<8x8xf32, #tpu.memory_space<vmem>>) attributes {dimension_semantics = [#tpu.dimension_semantics<parallel>], iteration_bounds = array<i64: 1>, scalar_prefetch = 0 : i64, scratch_operands = 0 : i64, tpu.core_type = #tpu.core_type<tc>, window_params = [{transform_indices = @transform_0, window_bounds = array<i64: 8, 16>}, {pipeline_mode = #tpu.pipeline_mode<synchronous>, transform_indices = @transform_1, window_bounds = array<i64: 16, 128>}, {pipeline_mode = #tpu.pipeline_mode<synchronous>, transform_indices = @transform_2, window_bounds = array<i64: 1, 128>}, {pipeline_mode = #tpu.pipeline_mode<synchronous>, transform_indices = @transform_3, window_bounds = array<i64: 1, 128>}, {pipeline_mode = #tpu.pipeline_mode<synchronous>, transform_indices = @transform_4, window_bounds = array<i64: 128, 64>}, {pipeline_mode = #tpu.pipeline_mode<synchronous>, transform_indices = @transform_5, window_bounds = array<i64: 1, 64>}, {pipeline_mode = #tpu.pipeline_mode<synchronous>, transform_indices = @transform_6, window_bounds = array<i64: 64, 8>}, {pipeline_mode = #tpu.pipeline_mode<synchronous>, transform_indices = @transform_7, window_bounds = array<i64: 1, 8>}, {transform_indices = @transform_8, window_bounds = array<i64: 8, 8>}]} {
    %c0 = arith.constant 0 : index
    %c0_0 = arith.constant 0 : index
    %0 = vector.load %arg1[%c0, %c0_0] : memref<8x16xf32, #tpu.memory_space<vmem>>, vector<8x16xf32>
    %1 = arith.truncf %0 : vector<8x16xf32> to vector<8x16xbf16>
    %c0_1 = arith.constant 0 : index
    %c0_2 = arith.constant 0 : index
    %2 = vector.load %arg2[%c0_1, %c0_2] : memref<16x128xbf16, #tpu.memory_space<vmem>>, vector<16x128xbf16>
    %cst = arith.constant dense<0.000000e+00> : vector<8x128xf32>
    %3 = tpu.matmul %1, %2, %cst {dimension_numbers = #tpu.dot_dimension_numbers<[1], [0], [0], [1], [0, 0, 1, 1], [], []>} : vector<8x16xbf16>, vector<16x128xbf16>, vector<8x128xf32> -> vector<8x128xf32>
    %cst_3 = arith.constant dense<0.000000e+00> : vector<8xf32>
    %4 = vector.multi_reduction <add>, %0, %cst_3 [1] : vector<8x16xf32> to vector<8xf32>
    %5 = vector.shape_cast %4 : vector<8xf32> to vector<8x1xf32>
    %cst_4 = arith.constant 1.600000e+01 : f32
    %6 = vector.broadcast %cst_4 : f32 to vector<8x1xf32>
    %7 = arith.divf %5, %6 : vector<8x1xf32>
    %8 = arith.mulf %0, %0 : vector<8x16xf32>
    %cst_5 = arith.constant dense<0.000000e+00> : vector<8xf32>
    %9 = vector.multi_reduction <add>, %8, %cst_5 [1] : vector<8x16xf32> to vector<8xf32>
    %10 = vector.shape_cast %9 : vector<8xf32> to vector<8x1xf32>
    %cst_6 = arith.constant 1.600000e+01 : f32
    %11 = vector.broadcast %cst_6 : f32 to vector<8x1xf32>
    %12 = arith.divf %10, %11 : vector<8x1xf32>
    %13 = arith.mulf %7, %7 : vector<8x1xf32>
    %14 = arith.subf %12, %13 : vector<8x1xf32>
    %cst_7 = arith.constant 0.000000e+00 : f32
    %15 = vector.broadcast %cst_7 : f32 to vector<8x1xf32>
    %16 = arith.maximumf %14, %15 : vector<8x1xf32>
    %cst_8 = arith.constant 9.99999974E-6 : f32
    %17 = vector.broadcast %cst_8 : f32 to vector<8x1xf32>
    %18 = arith.addf %16, %17 : vector<8x1xf32>
    %19 = math.rsqrt %18 : vector<8x1xf32>
    %c0_9 = arith.constant 0 : index
    %c0_10 = arith.constant 0 : index
    %20 = vector.load %arg3[%c0_9, %c0_10] : memref<1x128xf32, #tpu.memory_space<vmem>>, vector<1x128xf32>
    %21 = vector.broadcast %7 : vector<8x1xf32> to vector<8x128xf32>
    %22 = vector.broadcast %20 : vector<1x128xf32> to vector<8x128xf32>
    %23 = arith.mulf %21, %22 : vector<8x128xf32>
    %24 = arith.subf %3, %23 : vector<8x128xf32>
    %25 = vector.broadcast %19 : vector<8x1xf32> to vector<8x128xf32>
    %26 = arith.mulf %24, %25 : vector<8x128xf32>
    %c0_11 = arith.constant 0 : index
    %c0_12 = arith.constant 0 : index
    %27 = vector.load %arg4[%c0_11, %c0_12] : memref<1x128xf32, #tpu.memory_space<vmem>>, vector<1x128xf32>
    %28 = vector.broadcast %27 : vector<1x128xf32> to vector<8x128xf32>
    %29 = arith.addf %26, %28 : vector<8x128xf32>
    %cst_13 = arith.constant 0.000000e+00 : f32
    %30 = vector.broadcast %cst_13 : f32 to vector<8x128xf32>
    %31 = arith.maximumf %29, %30 : vector<8x128xf32>
    %32 = arith.truncf %31 : vector<8x128xf32> to vector<8x128xbf16>
    %c0_14 = arith.constant 0 : index
    %c0_15 = arith.constant 0 : index
    %33 = vector.load %arg5[%c0_14, %c0_15] : memref<128x64xbf16, #tpu.memory_space<vmem>>, vector<128x64xbf16>
    %cst_16 = arith.constant dense<0.000000e+00> : vector<8x64xf32>
    %34 = tpu.matmul %32, %33, %cst_16 {dimension_numbers = #tpu.dot_dimension_numbers<[1], [0], [0], [1], [0, 0, 1, 1], [], []>} : vector<8x128xbf16>, vector<128x64xbf16>, vector<8x64xf32> -> vector<8x64xf32>
    %c0_17 = arith.constant 0 : index
    %c0_18 = arith.constant 0 : index
    %35 = vector.load %arg6[%c0_17, %c0_18] : memref<1x64xf32, #tpu.memory_space<vmem>>, vector<1x64xf32>
    %36 = vector.broadcast %35 : vector<1x64xf32> to vector<8x64xf32>
    %37 = arith.addf %34, %36 : vector<8x64xf32>
    %cst_19 = arith.constant 0.000000e+00 : f32
    %38 = vector.broadcast %cst_19 : f32 to vector<8x64xf32>
    %39 = arith.maximumf %37, %38 : vector<8x64xf32>
    %40 = arith.truncf %39 : vector<8x64xf32> to vector<8x64xbf16>
    %c0_20 = arith.constant 0 : index
    %c0_21 = arith.constant 0 : index
    %41 = vector.load %arg7[%c0_20, %c0_21] : memref<64x8xbf16, #tpu.memory_space<vmem>>, vector<64x8xbf16>
    %cst_22 = arith.constant dense<0.000000e+00> : vector<8x8xf32>
    %42 = tpu.matmul %40, %41, %cst_22 {dimension_numbers = #tpu.dot_dimension_numbers<[1], [0], [0], [1], [0, 0, 1, 1], [], []>} : vector<8x64xbf16>, vector<64x8xbf16>, vector<8x8xf32> -> vector<8x8xf32>
    %c0_23 = arith.constant 0 : index
    %c0_24 = arith.constant 0 : index
    %43 = vector.load %arg8[%c0_23, %c0_24] : memref<1x8xf32, #tpu.memory_space<vmem>>, vector<1x8xf32>
    %44 = vector.broadcast %43 : vector<1x8xf32> to vector<8x8xf32>
    %45 = arith.addf %42, %44 : vector<8x8xf32>
    %c0_25 = arith.constant 0 : index
    %c0_26 = arith.constant 0 : index
    %46 = vector.load %arg9[%c0_25, %c0_26] : memref<8x8xf32, #tpu.memory_space<vmem>>, vector<8x8xf32>
    tpu.vector_store %arg9[%c0_25, %c0_26], %45 {strides = array<i32>} : memref<8x8xf32, #tpu.memory_space<vmem>>, vector<8x8xf32>,
    return
  }
  func.func @transform_0(%arg0: i32) -> (i32, i32) {
    %c0_i32 = arith.constant 0 : i32
    %c0_i32_0 = arith.constant 0 : i32
    return %arg0, %c0_i32 : i32, i32
  }
  func.func @transform_1(%arg0: i32) -> (i32, i32) {
    %c0_i32 = arith.constant 0 : i32
    %c0_i32_0 = arith.constant 0 : i32
    %c0_i32_1 = arith.constant 0 : i32
    return %c0_i32, %c0_i32_0 : i32, i32
  }
  func.func @transform_2(%arg0: i32) -> (i32, i32) {
    %c0_i32 = arith.constant 0 : i32
    %c0_i32_0 = arith.constant 0 : i32
    %c0_i32_1 = arith.constant 0 : i32
    return %c0_i32, %c0_i32_0 : i32, i32
  }
  func.func @transform_3(%arg0: i32) -> (i32, i32) {
    %c0_i32 = arith.constant 0 : i32
    %c0_i32_0 = arith.constant 0 : i32
    %c0_i32_1 = arith.constant 0 : i32
    return %c0_i32, %c0_i32_0 : i32, i32
  }
  func.func @transform_4(%arg0: i32) -> (i32, i32) {
    %c0_i32 = arith.constant 0 : i32
    %c0_i32_0 = arith.constant 0 : i32
    %c0_i32_1 = arith.constant 0 : i32
    return %c0_i32, %c0_i32_0 : i32, i32
  }
  func.func @transform_5(%arg0: i32) -> (i32, i32) {
    %c0_i32 = arith.constant 0 : i32
    %c0_i32_0 = arith.constant 0 : i32
    %c0_i32_1 = arith.constant 0 : i32
    return %c0_i32, %c0_i32_0 : i32, i32
  }
  func.func @transform_6(%arg0: i32) -> (i32, i32) {
    %c0_i32 = arith.constant 0 : i32
    %c0_i32_0 = arith.constant 0 : i32
    %c0_i32_1 = arith.constant 0 : i32
    return %c0_i32, %c0_i32_0 : i32, i32
  }
  func.func @transform_7(%arg0: i32) -> (i32, i32) {
    %c0_i32 = arith.constant 0 : i32
    %c0_i32_0 = arith.constant 0 : i32
    %c0_i32_1 = arith.constant 0 : i32
    return %c0_i32, %c0_i32_0 : i32, i32
  }
  func.func @transform_8(%arg0: i32) -> (i32, i32) {
    %c0_i32 = arith.constant 0 : i32
    %c0_i32_0 = arith.constant 0 : i32
    return %arg0, %c0_i32 : i32, i32
  }
}

</mosaic_0001>

<llo_original>
// kernel: actor_critic_forward.1
$region0: #{actor_critic_forward.1}
  #allocation0 [shape = 'u32[]', space=smem, size = 0x4, offset = 0x4, fixed_abs, tag = 'smem constant byte address 0x4 - core index']
  #allocation1 [shape = 'u32[144,128]{1,0:T(1,128)}', space=vmem, size = 0x12000, scoped, tag = 'internal scratch']
  %s0 = inlined_call_operand.vmem [shape: f32[8,16], index: 0, kind: input, shape index: {}]
  %s1 = inlined_call_operand.vmem [shape: bf16[16,128], index: 1, kind: input, shape index: {}]
  %s2 = inlined_call_operand.vmem [shape: f32[1,128], index: 2, kind: input, shape index: {}]
  %s3 = inlined_call_operand.vmem [shape: f32[1,128], index: 3, kind: input, shape index: {}]
  %s4 = inlined_call_operand.vmem [shape: bf16[128,64], index: 4, kind: input, shape index: {}]
  %s5 = inlined_call_operand.vmem [shape: f32[1,64], index: 5, kind: input, shape index: {}]
  %s6 = inlined_call_operand.vmem [shape: bf16[64,8], index: 6, kind: input, shape index: {}]
  %s7 = inlined_call_operand.vmem [shape: f32[1,8], index: 7, kind: input, shape index: {}]
  %s8 = inlined_call_operand.vmem [shape: f32[8,8], index: 8, kind: output, shape index: {}]
  %s9 = sld [smem:[#allocation0]]
  $region42: #{actor_critic_forward.1} parent=0
    _
  %s11 = ssub.s32 1, %s9
  %s12 = scalar_select 0, %s11, %s9
  // Predicated region
  $region2: #{actor_critic_forward.1} parent=0 // pred_check
    _
  $region3: #{actor_critic_forward.1} parent=0 // pred_check_branch
    %14 = sbr.rel (0) target = $region5
  $region4: #{actor_critic_forward.1} parent=0 // pred_region
    _
  $region5: #{actor_critic_forward.1} parent=0 // pred_fallthru
    _
  // Predicated region
  $region6: #{actor_critic_forward.1} parent=0 // pred_check
    _
  $region7: #{actor_critic_forward.1} parent=0 // pred_check_branch
    %16 = sbr.rel (0) target = $region9
  $region8: #{actor_critic_forward.1} parent=0 // pred_region
    _
  $region9: #{actor_critic_forward.1} parent=0 // pred_fallthru
    _
  // Predicated region
  $region10: #{actor_critic_forward.1} parent=0 // pred_check
    _
  $region11: #{actor_critic_forward.1} parent=0 // pred_check_branch
    %18 = sbr.rel (0) target = $region13
  $region12: #{actor_critic_forward.1} parent=0 // pred_region
    _
  $region13: #{actor_critic_forward.1} parent=0 // pred_fallthru
    _
  // Predicated region
  $region14: #{actor_critic_forward.1} parent=0 // pred_check
    _
  $region15: #{actor_critic_forward.1} parent=0 // pred_check_branch
    %20 = sbr.rel (0) target = $region17
  $region16: #{actor_critic_forward.1} parent=0 // pred_region
    _
  $region17: #{actor_critic_forward.1} parent=0 // pred_fallthru
    _
  // Predicated region
  $region18: #{actor_critic_forward.1} parent=0 // pred_check
    _
  $region19: #{actor_critic_forward.1} parent=0 // pred_check_branch
    %22 = sbr.rel (0) target = $region21
  $region20: #{actor_critic_forward.1} parent=0 // pred_region
    _
  $region21: #{actor_critic_forward.1} parent=0 // pred_fallthru
    _
  // Predicated region
  $region22: #{actor_critic_forward.1} parent=0 // pred_check
    _
  $region23: #{actor_critic_forward.1} parent=0 // pred_check_branch
    %24 = sbr.rel (0) target = $region25
  $region24: #{actor_critic_forward.1} parent=0 // pred_region
    _
  $region25: #{actor_critic_forward.1} parent=0 // pred_fallthru
    _
  // Predicated region
  $region26: #{actor_critic_forward.1} parent=0 // pred_check
    _
  $region27: #{actor_critic_forward.1} parent=0 // pred_check_branch
    %26 = sbr.rel (0) target = $region29
  $region28: #{actor_critic_forward.1} parent=0 // pred_region
    _
  $region29: #{actor_critic_forward.1} parent=0 // pred_fallthru
    _
  // Predicated region
  $region30: #{actor_critic_forward.1} parent=0 // pred_check
    _
  $region31: #{actor_critic_forward.1} parent=0 // pred_check_branch
    %28 = sbr.rel (0) target = $region33
  $region32: #{actor_critic_forward.1} parent=0 // pred_region
    _
  $region33: #{actor_critic_forward.1} parent=0 // pred_fallthru
    _
  %v30 = vld [vmem:[%s0] sm:$0xff]
  %v31 = vpack.c.bf16 %v30, %v30
  %v32 = vld [vmem:[%s1] sm:$0xf]
  %v33 = vld [vmem:[%s1 + $0x4] sm:$0xf]
  %v36 = vunpack.c.l.b16 %v32
  %v37 = vunpack.c.l.b16 %v33
  %v38 = vpack.c.b16 %v37, %v36
  %vm40 = vcmask 130048
  %v42 = vsel %vm40, %v31, 0
  %44 = vmatprep.subr.bf16.mxu0 0
  %45 = vmatpush1.bf16.msra.mxu0 0
  %46 = vmatprep.subr.bf16.mxu0 0
  %47 = vmatpush1.bf16.msra.mxu0 0
  %48 = vmatprep.subr.bf16.mxu0 0
  %49 = vmatpush1.bf16.msra.mxu0 0
  %50 = vmatprep.subr.bf16.mxu0 0
  %51 = vmatpush1.bf16.msra.mxu0 0
  %52 = vmatprep.subr.bf16.mxu0 0
  %53 = vmatpush1.bf16.msra.mxu0 0
  %54 = vmatprep.subr.bf16.mxu0 0
  %55 = vmatpush1.bf16.msra.mxu0 0
  %56 = vmatprep.subr.bf16.mxu0 0
  %57 = vmatpush1.bf16.msra.mxu0 0
  %58 = vmatprep.subr.bf16.mxu0 0
  %59 = vmatpush1.bf16.msra.mxu0 %v38
  %60 = vmatprep.subr.bf16.mxu0 0
  %61 = vmatpush2.bf16.msra.mxu0 0
  %62 = vmatprep.subr.bf16.mxu0 0
  %63 = vmatpush2.bf16.msra.mxu0 0
  %64 = vmatprep.subr.bf16.mxu0 0
  %65 = vmatpush2.bf16.msra.mxu0 0
  %66 = vmatprep.subr.bf16.mxu0 0
  %67 = vmatpush2.bf16.msra.mxu0 0
  %68 = vmatprep.subr.bf16.mxu0 0
  %69 = vmatpush2.bf16.msra.mxu0 0
  %70 = vmatprep.subr.bf16.mxu0 0
  %71 = vmatpush2.bf16.msra.mxu0 0
  %72 = vmatprep.subr.bf16.mxu0 0
  %73 = vmatpush2.bf16.msra.mxu0 0
  %74 = vmatprep.subr.bf16.mxu0 0
  %75 = vmatpush2.bf16.msra.mxu0 0
  %76 = vmatprep.mubr.bf16.mxu0 0
  %77 = vmatmul.mubr.bf16.gmra.mxu0 %v42
  %v78 = vpop.f32.mrf.mxu0
  %v79 = vadd.f32 0.0, %v78
  %v80 = vpop.f32.mrf.mxu0
  %v81 = vpop.f32.mrf.mxu0
  %v82 = vpop.f32.mrf.mxu0
  %83 = vdwg.mxu0
  %v84 = vsel %vm40, %v30, 0.0
  %85 = vadd.xlane.f32.xlu0 %v84
  %v86 = vpop.xlane.xlu0 %85
  %v87 = vrcp.pop 16.0
  %v88 = vmul.f32 %v86, %v87
  %v89 = vmul.f32 %v30, %v30
  %v90 = vsel %vm40, %v89, 0.0
  %91 = vadd.xlane.f32.xlu0 %v90
  %v92 = vpop.xlane.xlu0 %91
  %v93 = vmul.f32 %v92, %v87
  %v94 = vmul.f32 %v88, %v88
  %v95 = vsub.f32 %v93, %v94
  %v96 = vmax.f32 %v95, 0.0
  %v97 = vadd.f32 %v96, 1e-05
  %v98 = vrsqrt.pop %v97
  %v99 = vld [vmem:[%s2] sm:$0x1]
  %v101 = vlaneseq
  %v102 = vshrl.u32 %v101, 7
  %v103 = vsub.s32 0, %v102
  %v104 = vrot.slane %v99, %v103
  %v106 = vmul.f32 %v88, %v104
  %v107 = vsub.f32 %v79, %v106
  %v108 = vmul.f32 %v107, %v98
  %v109 = vld [vmem:[%s3] sm:$0x1]
  %v111 = vlaneseq
  %v112 = vshrl.u32 %v111, 7
  %v113 = vsub.s32 0, %v112
  %v114 = vrot.slane %v109, %v113
  %v116 = vadd.f32 %v108, %v114
  %v117 = vmax.f32 %v116, 0.0
  %v118 = vpack.c.bf16 %v117, %v117
  %v119 = vld [vmem:[%s4] sm:$0xf]
  %v120 = vld [vmem:[%s4 + $0x4] sm:$0xf]
  %v121 = vld [vmem:[%s4 + $0x8] sm:$0xf]
  %v122 = vld [vmem:[%s4 + $0xc] sm:$0xf]
  %v123 = vld [vmem:[%s4 + $0x10] sm:$0xf]
  %v124 = vld [vmem:[%s4 + $0x14] sm:$0xf]
  %v125 = vld [vmem:[%s4 + $0x18] sm:$0xf]
  %v126 = vld [vmem:[%s4 + $0x1c] sm:$0xf]
  %v127 = vld [vmem:[%s4 + $0x20] sm:$0xf]
  %v128 = vld [vmem:[%s4 + $0x24] sm:$0xf]
  %v129 = vld [vmem:[%s4 + $0x28] sm:$0xf]
  %v130 = vld [vmem:[%s4 + $0x2c] sm:$0xf]
  %v131 = vld [vmem:[%s4 + $0x30] sm:$0xf]
  %v132 = vld [vmem:[%s4 + $0x34] sm:$0xf]
  %v133 = vld [vmem:[%s4 + $0x38] sm:$0xf]
  %v134 = vld [vmem:[%s4 + $0x3c] sm:$0xf]
  %v135 = vld [vmem:[%s5] sm:$0x1]
  %v137 = vlaneseq
  %v138 = vshrl.u32 %v137, 7
  %v139 = vsub.s32 0, %v138
  %v140 = vrot.slane %v135, %v139
  %v158 = vunpack.c.l.b16 %v119
  %v159 = vunpack.c.l.b16 %v120
  %v160 = vunpack.c.l.b16 %v121
  %v161 = vunpack.c.l.b16 %v122
  %v162 = vunpack.c.l.b16 %v123
  %v163 = vunpack.c.l.b16 %v124
  %v164 = vunpack.c.l.b16 %v125
  %v165 = vunpack.c.l.b16 %v126
  %v166 = vunpack.c.l.b16 %v127
  %v167 = vunpack.c.l.b16 %v128
  %v168 = vunpack.c.l.b16 %v129
  %v169 = vunpack.c.l.b16 %v130
  %v170 = vunpack.c.l.b16 %v131
  %v171 = vunpack.c.l.b16 %v132
  %v172 = vunpack.c.l.b16 %v133
  %v173 = vunpack.c.l.b16 %v134
  %v174 = vpack.c.b16 %v159, %v158
  %v175 = vpack.c.b16 %v161, %v160
  %v176 = vpack.c.b16 %v163, %v162
  %v177 = vpack.c.b16 %v165, %v164
  %v178 = vpack.c.b16 %v167, %v166
  %v179 = vpack.c.b16 %v169, %v168
  %v180 = vpack.c.b16 %v171, %v170
  %v181 = vpack.c.b16 %v173, %v172
  %190 = vmatprep.subr.bf16.mxu0 0
  %191 = vmatpush1.bf16.msra.mxu0 %v181
  %192 = vmatprep.subr.bf16.mxu0 0
  %193 = vmatpush1.bf16.msra.mxu0 %v180
  %194 = vmatprep.subr.bf16.mxu0 0
  %195 = vmatpush1.bf16.msra.mxu0 %v179
  %196 = vmatprep.subr.bf16.mxu0 0
  %197 = vmatpush1.bf16.msra.mxu0 %v178
  %198 = vmatprep.subr.bf16.mxu0 0
  %199 = vmatpush1.bf16.msra.mxu0 %v177
  %200 = vmatprep.subr.bf16.mxu0 0
  %201 = vmatpush1.bf16.msra.mxu0 %v176
  %202 = vmatprep.subr.bf16.mxu0 0
  %203 = vmatpush1.bf16.msra.mxu0 %v175
  %204 = vmatprep.subr.bf16.mxu0 0
  %205 = vmatpush1.bf16.msra.mxu0 %v174
  %206 = vmatprep.subr.bf16.mxu0 0
  %207 = vmatpush2.bf16.msra.mxu0 0
  %208 = vmatprep.subr.bf16.mxu0 0
  %209 = vmatpush2.bf16.msra.mxu0 0
  %210 = vmatprep.subr.bf16.mxu0 0
  %211 = vmatpush2.bf16.msra.mxu0 0
  %212 = vmatprep.subr.bf16.mxu0 0
  %213 = vmatpush2.bf16.msra.mxu0 0
  %214 = vmatprep.subr.bf16.mxu0 0
  %215 = vmatpush2.bf16.msra.mxu0 0
  %216 = vmatprep.subr.bf16.mxu0 0
  %217 = vmatpush2.bf16.msra.mxu0 0
  %218 = vmatprep.subr.bf16.mxu0 0
  %219 = vmatpush2.bf16.msra.mxu0 0
  %220 = vmatprep.subr.bf16.mxu0 0
  %221 = vmatpush2.bf16.msra.mxu0 0
  %222 = vmatprep.mubr.bf16.mxu0 0
  %223 = vmatmul.mubr.bf16.gmra.mxu0 %v118
  %v224 = vpop.f32.mrf.mxu0
  %v225 = vadd.f32 %v140, %v224
  %v226 = vpop.f32.mrf.mxu0
  %v227 = vpop.f32.mrf.mxu0
  %v228 = vpop.f32.mrf.mxu0
  %229 = vdwg.mxu0
  %v230 = vmax.f32 %v225, 0.0
  %v231 = vpack.c.bf16 %v230, %v230
  %v232 = vld [vmem:[%s6] sm:$0xf]
  %v233 = vld [vmem:[%s6 + $0x4] sm:$0xf]
  %v234 = vld [vmem:[%s6 + $0x8] sm:$0xf]
  %v235 = vld [vmem:[%s6 + $0xc] sm:$0xf]
  %v236 = vld [vmem:[%s6 + $0x10] sm:$0xf]
  %v237 = vld [vmem:[%s6 + $0x14] sm:$0xf]
  %v238 = vld [vmem:[%s6 + $0x18] sm:$0xf]
  %v239 = vld [vmem:[%s6 + $0x1c] sm:$0xf]
  %v240 = vld [vmem:[%s7] sm:$0x1]
  %v242 = vlaneseq
  %v243 = vshrl.u32 %v242, 7
  %v244 = vsub.s32 0, %v243
  %v245 = vrot.slane %v240, %v244
  %v255 = vunpack.c.l.b16 %v232
  %v256 = vunpack.c.l.b16 %v233
  %v257 = vunpack.c.l.b16 %v234
  %v258 = vunpack.c.l.b16 %v235
  %v259 = vunpack.c.l.b16 %v236
  %v260 = vunpack.c.l.b16 %v237
  %v261 = vunpack.c.l.b16 %v238
  %v262 = vunpack.c.l.b16 %v239
  %v263 = vpack.c.b16 %v256, %v255
  %v264 = vpack.c.b16 %v258, %v257
  %v265 = vpack.c.b16 %v260, %v259
  %v266 = vpack.c.b16 %v262, %v261
  %vm271 = vcmask 523264
  %v273 = vsel %vm271, %v231, 0
  %275 = vmatprep.subr.bf16.mxu0 0
  %276 = vmatpush1.bf16.msra.mxu0 0
  %277 = vmatprep.subr.bf16.mxu0 0
  %278 = vmatpush1.bf16.msra.mxu0 0
  %279 = vmatprep.subr.bf16.mxu0 0
  %280 = vmatpush1.bf16.msra.mxu0 0
  %281 = vmatprep.subr.bf16.mxu0 0
  %282 = vmatpush1.bf16.msra.mxu0 0
  %283 = vmatprep.subr.bf16.mxu0 0
  %284 = vmatpush1.bf16.msra.mxu0 %v266
  %285 = vmatprep.subr.bf16.mxu0 0
  %286 = vmatpush1.bf16.msra.mxu0 %v265
  %287 = vmatprep.subr.bf16.mxu0 0
  %288 = vmatpush1.bf16.msra.mxu0 %v264
  %289 = vmatprep.subr.bf16.mxu0 0
  %290 = vmatpush1.bf16.msra.mxu0 %v263
  %291 = vmatprep.subr.bf16.mxu0 0
  %292 = vmatpush2.bf16.msra.mxu0 0
  %293 = vmatprep.subr.bf16.mxu0 0
  %294 = vmatpush2.bf16.msra.mxu0 0
  %295 = vmatprep.subr.bf16.mxu0 0
  %296 = vmatpush2.bf16.msra.mxu0 0
  %297 = vmatprep.subr.bf16.mxu0 0
  %298 = vmatpush2.bf16.msra.mxu0 0
  %299 = vmatprep.subr.bf16.mxu0 0
  %300 = vmatpush2.bf16.msra.mxu0 0
  %301 = vmatprep.subr.bf16.mxu0 0
  %302 = vmatpush2.bf16.msra.mxu0 0
  %303 = vmatprep.subr.bf16.mxu0 0
  %304 = vmatpush2.bf16.msra.mxu0 0
  %305 = vmatprep.subr.bf16.mxu0 0
  %306 = vmatpush2.bf16.msra.mxu0 0
  %307 = vmatprep.mubr.bf16.mxu0 0
  %308 = vmatmul.mubr.bf16.gmra.mxu0 %v273
  %v309 = vpop.f32.mrf.mxu0
  %v310 = vadd.f32 %v245, %v309
  %v311 = vpop.f32.mrf.mxu0
  %v312 = vpop.f32.mrf.mxu0
  %v313 = vpop.f32.mrf.mxu0
  %314 = vdwg.mxu0
  %vm315 = vcmask 64512
  %316 = vst.msk [vmem:[%s8] sm:$0xff] %vm315, %v310
  // Predicated region
  $region34: #{actor_critic_forward.1} parent=0 // pred_check
    _
  $region35: #{actor_critic_forward.1} parent=0 // pred_check_branch
    %318 = sbr.rel (0) target = $region37
  $region36: #{actor_critic_forward.1} parent=0 // pred_region
    _
  $region37: #{actor_critic_forward.1} parent=0 // pred_fallthru
    _
  // Predicated region
  $region38: #{actor_critic_forward.1} parent=0 // pred_check
    _
  $region39: #{actor_critic_forward.1} parent=0 // pred_check_branch
    %320 = sbr.rel (0) target = $region41
  $region40: #{actor_critic_forward.1} parent=0 // pred_region
    _
  $region41: #{actor_critic_forward.1} parent=0 // pred_fallthru
    _

</llo_original>
